<compile_context>
chip_gen: v7x
topology: tpu7x:2x2x1
jax: 0.10.0
libtpu: 0.0.40
codegen_flags: <defaults>
</compile_context>

<pallas_src>
import jax
import jax.numpy as jnp
from jax.experimental import pallas as pl
from jax.experimental.pallas import tpu as pltpu


def _round_up(x, m):
    return ((x + m - 1) // m) * m


# ------------------------------------------------------------------
# Kernel: tiled patch projection  out = relu(X @ W + b)
#   X (R,K) bf16, W (K,N) bf16, b (1,N) f32 -> out (R,N) bf16
#   grid = (R/tm, N/tn, K/tk); f32 accumulator in VMEM scratch; bias + ReLU
#   applied once, on the last K step only; k==0 writes directly (no zero-fill).
# ------------------------------------------------------------------
def _proj_kernel(x_ref, w_ref, b_ref, o_ref, acc_ref):
    k = pl.program_id(2)

    prod = jnp.dot(x_ref[...], w_ref[...], preferred_element_type=jnp.float32)

    @pl.when(k == 0)
    def _():
        acc_ref[...] = prod

    @pl.when(k > 0)
    def _():
        acc_ref[...] += prod

    @pl.when(k == pl.num_programs(2) - 1)
    def _():
        acc = acc_ref[...] + b_ref[...]                # (tm, tn) + (1, tn)
        o_ref[...] = jnp.maximum(acc, 0.0).astype(o_ref.dtype)


# Double-buffered working-set budget; sized so one tile plan also fits v7x's
# 64 MiB/TC (scoped default 32 MiB, raised via vmem_limit_bytes below).
_VMEM_TILE_BUDGET = 40 * 1024 * 1024


def _tile_footprint_bytes(tm, tk, tn):
    # 2x bf16 X blocks, 2x bf16 W blocks, 2x bf16 out blocks, f32 acc, bias.
    return (2 * tm * tk * 2) + (2 * tk * tn * 2) + (2 * tm * tn * 2) \
        + (tm * tn * 4) + (2 * tn * 4)


def _choose_tiles(R, K, N):
    Kp = _round_up(K, 128)
    Np = _round_up(N, 128)

    # Resident-W plan: cover the full padded K and N per step when they are of
    # ResNet scale, so W is DMA'd from HBM exactly once and X streams once.
    # Fall back to streaming tiles only for very large K / N.
    tk = Kp if Kp <= 4096 else 2048
    tn = Np if Np <= 2048 else 1024

    # tm: large enough to amortize the ~0.35us/step grid overhead, 16-aligned
    # for bf16 sublane packing; realistic R (= B*Hf*Wf) leaves >= 2 row blocks
    # so both v7x TensorCores get work on the 'parallel' R axis.
    tm = min(512, _round_up(R, 16))

    # Shrink until the double-buffered working set fits the budget.
    while _tile_footprint_bytes(tm, tk, tn) > _VMEM_TILE_BUDGET and tm > 16:
        tm = max(16, tm // 2)
    while _tile_footprint_bytes(tm, tk, tn) > _VMEM_TILE_BUDGET and tk > 512:
        tk = max(512, tk // 2)
    while _tile_footprint_bytes(tm, tk, tn) > _VMEM_TILE_BUDGET and tn > 512:
        tn = max(512, tn // 2)

    return tm, tk, tn


def _patch_projection(x_patches, w, b):
    """x_patches (R,K) bf16, w (K,N) bf16, b (1,N) f32 -> relu(x@w+b) (R,N) bf16."""
    R, K = x_patches.shape
    _, N = w.shape

    tm, tk, tn = _choose_tiles(R, K, N)
    Rp, Kp, Np = _round_up(R, tm), _round_up(K, tk), _round_up(N, tn)

    # Zero-padding is exact: padded K rows of W contribute 0, padded N columns
    # give relu(0 + 0) = 0, padded R rows are sliced off below.  Padding N to
    # a multiple of 128 keeps the output stores lane-dense (unmasked vst).
    xp = x_patches.astype(jnp.bfloat16)
    if (Rp, Kp) != (R, K):
        xp = jnp.pad(xp, ((0, Rp - R), (0, Kp - K)))
    wp = w.astype(jnp.bfloat16)
    if (Kp, Np) != (K, N):
        wp = jnp.pad(wp, ((0, Kp - K), (0, Np - N)))
    bp = b.astype(jnp.float32)
    if Np != N:
        bp = jnp.pad(bp, ((0, 0), (0, Np - N)))

    grid = (Rp // tm, Np // tn, Kp // tk)

    cost = pl.CostEstimate(
        flops=2 * Rp * Kp * Np,
        transcendentals=0,
        bytes_accessed=Rp * Kp * 2 + Kp * Np * 2 + Rp * Np * 2 + Np * 4,
    )

    footprint = _tile_footprint_bytes(tm, tk, tn)
    vmem_limit = int(min(max(2 * footprint, 32 << 20), 48 << 20))

    out = pl.pallas_call(
        _proj_kernel,
        out_shape=jax.ShapeDtypeStruct((Rp, Np), jnp.bfloat16),
        grid=grid,
        in_specs=[
            pl.BlockSpec((tm, tk), lambda i, j, k: (i, k)),
            pl.BlockSpec((tk, tn), lambda i, j, k: (k, j)),
            pl.BlockSpec((1, tn), lambda i, j, k: (0, j)),
        ],
        out_specs=pl.BlockSpec((tm, tn), lambda i, j, k: (i, j)),
        scratch_shapes=[pltpu.VMEM((tm, tn), jnp.float32)],
        compiler_params=pltpu.CompilerParams(
            dimension_semantics=("parallel", "parallel", "arbitrary"),
            vmem_limit_bytes=vmem_limit),
        cost_estimate=cost,
    )(xp, wp, bp)

    if (Rp, Np) != (R, N):                 # slice only if padding occurred
        out = out[:R, :N]
    return out


# ------------------------------------------------------------------
# Nearest-neighbour mask downsample (exact PyTorch F.interpolate semantics:
# index = floor(i * in / out)).  Zero-FLOP gather -> plain XLA slice.
# ------------------------------------------------------------------
def _mask_nearest_downsample(mask, out_hw):
    B, H, W = mask.shape
    Hf, Wf = out_hw
    idx_h = (jnp.arange(Hf) * H) // Hf
    idx_w = (jnp.arange(Wf) * W) // Wf
    return mask[:, idx_h][:, :, idx_w]


# ------------------------------------------------------------------
# BackboneBase equivalent
# ------------------------------------------------------------------
class NestedTensor:
    def __init__(self, tensors, mask):
        self.tensors = tensors
        self.mask = mask


def _extract_patches(x, patch):
    """NCHW -> im2col rows (B*Hf*Wf, C*P*P).  Runs in the input's dtype (bf16)."""
    # TODO(synk): fold this im2col into the kernel's index_map (NHWC end-to-end)
    #             so patch extraction happens as the input DMA on ResNet-sized
    #             inputs instead of a separate HBM pass.
    B, C, H, W = x.shape
    P = patch
    Hf, Wf = H // P, W // P
    p = x.reshape(B, C, Hf, P, Wf, P)
    p = p.transpose(0, 2, 4, 1, 3, 5)                  # (B, Hf, Wf, C, P, P)
    return p.reshape(B * Hf * Wf, C * P * P), (Hf, Wf)


class BackboneBase:
    """Synthetic BackboneBase: body = single patchify conv ('layer4')."""

    def __init__(self, in_channels, num_channels, patch, key,
                 return_interm_layers=False):
        self.num_channels = num_channels
        self.patch = patch
        self.return_interm_layers = return_interm_layers
        k = in_channels * patch * patch
        kw, kb = jax.random.split(key)
        # bf16 weights feed the MXU at full rate; f32 bias for the epilogue.
        self.w = (jax.random.normal(kw, (k, num_channels), jnp.float32)
                  * 0.02).astype(jnp.bfloat16)
        self.b = jax.random.normal(kb, (1, num_channels), jnp.float32) * 0.02

    def _body(self, x):
        B, C, H, W = x.shape
        # Cast to bf16 BEFORE im2col so the activation makes a single bf16 HBM
        # pass instead of an f32 transpose followed by a bf16 copy.
        x = x.astype(jnp.bfloat16)
        patches, (Hf, Wf) = _extract_patches(x, self.patch)
        feat = _patch_projection(patches, self.w, self.b)      # (B*Hf*Wf, N) bf16
        feat = feat.reshape(B, Hf, Wf, self.num_channels)
        # TODO(synk): downstream DETR flattens to (HW, B, C) anyway; keeping
        #             NHWC would drop this transpose.  Kept NCHW to match the
        #             PyTorch module's output layout.
        feat = feat.transpose(0, 3, 1, 2)                      # NCHW like torch
        # Only 'layer4' is returned when return_interm_layers=False (key 0).
        return {0: feat}

    def forward(self, tensor_list: NestedTensor):
        xs = self._body(tensor_list.tensors)
        out = {}
        for name, x in xs.items():
            mask = _mask_nearest_downsample(tensor_list.mask, x.shape[-2:])
            out[name] = NestedTensor(x, mask)
        return out


if __name__ == "__main__":
    key = jax.random.PRNGKey(0)
    k_img, k_mask, k_param = jax.random.split(key, 3)

    B, C, H, W = 2, 4, 16, 16
    num_channels = 32
    patch = 4

    images = jax.random.normal(k_img, (B, C, H, W), jnp.float32)
    # padding mask: True = padded pixel
    mask = jax.random.uniform(k_mask, (B, H, W)) > 0.7

    backbone = BackboneBase(C, num_channels, patch, k_param,
                            return_interm_layers=False)
    out = backbone.forward(NestedTensor(images, mask))

    feat = out[0].tensors
    feat_mask = out[0].mask
    jax.block_until_ready(feat)
    jax.block_until_ready(feat_mask)

    assert feat.shape == (B, num_channels, H // patch, W // patch)
    assert feat.dtype == jnp.bfloat16
    assert feat_mask.shape == (B, H // patch, W // patch)
    assert feat_mask.dtype == jnp.bool_

    # sanity 1: nearest-neighbour downsample == strided sampling
    ref_mask = mask[:, ::patch, ::patch]
    assert bool(jnp.all(feat_mask == ref_mask))

    # sanity 2: Pallas projection matches a plain-JAX bf16 reference
    patches_ref, (Hf, Wf) = _extract_patches(images.astype(jnp.bfloat16), patch)
    ref = jnp.maximum(
        jnp.dot(patches_ref.astype(jnp.float32),
                backbone.w.astype(jnp.float32)) + backbone.b, 0.0)
    ref = ref.reshape(B, Hf, Wf, num_channels).transpose(0, 3, 1, 2)
    assert bool(jnp.allclose(feat.astype(jnp.float32), ref, atol=2e-2, rtol=2e-2))

    print("KERNEL_OK")
</pallas_src>

<mosaic_0001>
module attributes {stable_mosaic.version = 11 : i64} {
  func.func @_proj_kernel(%arg0: i32, %arg1: i32, %arg2: i32, %arg3: memref<32x128xbf16, #tpu.memory_space<vmem>>, %arg4: memref<128x128xbf16, #tpu.memory_space<vmem>>, %arg5: memref<1x128xf32, #tpu.memory_space<vmem>>, %arg6: memref<32x128xbf16, #tpu.memory_space<vmem>>, %arg7: memref<32x128xf32, #tpu.memory_space<vmem>>) attributes {dimension_semantics = [#tpu.dimension_semantics<parallel>, #tpu.dimension_semantics<parallel>, #tpu.dimension_semantics<arbitrary>], iteration_bounds = array<i64: 1, 1, 1>, scalar_prefetch = 0 : i64, scratch_operands = 1 : i64, tpu.core_type = #tpu.core_type<tc>, window_params = [{transform_indices = @transform_0, window_bounds = array<i64: 32, 128>}, {transform_indices = @transform_1, window_bounds = array<i64: 128, 128>}, {transform_indices = @transform_2, window_bounds = array<i64: 1, 128>}, {transform_indices = @transform_3, window_bounds = array<i64: 32, 128>}]} {
    %c0 = arith.constant 0 : index
    %c0_0 = arith.constant 0 : index
    %0 = vector.load %arg3[%c0, %c0_0] : memref<32x128xbf16, #tpu.memory_space<vmem>>, vector<32x128xbf16>
    %c0_1 = arith.constant 0 : index
    %c0_2 = arith.constant 0 : index
    %1 = vector.load %arg4[%c0_1, %c0_2] : memref<128x128xbf16, #tpu.memory_space<vmem>>, vector<128x128xbf16>
    %cst = arith.constant dense<0.000000e+00> : vector<32x128xf32>
    %2 = tpu.matmul %0, %1, %cst {dimension_numbers = #tpu.dot_dimension_numbers<[1], [0], [0], [1], [0, 0, 1, 1], [], []>} : vector<32x128xbf16>, vector<128x128xbf16>, vector<32x128xf32> -> vector<32x128xf32>
    %c0_i32 = arith.constant 0 : i32
    %3 = arith.cmpi eq, %arg2, %c0_i32 : i32
    %4 = arith.extui %3 : i1 to i32
    %c0_i32_3 = arith.constant 0 : i32
    %5 = arith.cmpi ne, %4, %c0_i32_3 : i32
    scf.if %5 {
      %c0_8 = arith.constant 0 : index
      %c0_9 = arith.constant 0 : index
      %12 = vector.load %arg7[%c0_8, %c0_9] : memref<32x128xf32, #tpu.memory_space<vmem>>, vector<32x128xf32>
      tpu.vector_store %arg7[%c0_8, %c0_9], %2 {strides = array<i32>} : memref<32x128xf32, #tpu.memory_space<vmem>>, vector<32x128xf32>,
    } else {
    }
    %c0_i32_4 = arith.constant 0 : i32
    %6 = arith.cmpi sgt, %arg2, %c0_i32_4 : i32
    %7 = arith.extui %6 : i1 to i32
    %c0_i32_5 = arith.constant 0 : i32
    %8 = arith.cmpi ne, %7, %c0_i32_5 : i32
    scf.if %8 {
      %c0_8 = arith.constant 0 : index
      %c0_9 = arith.constant 0 : index
      %12 = vector.load %arg7[%c0_8, %c0_9] : memref<32x128xf32, #tpu.memory_space<vmem>>, vector<32x128xf32>
      %13 = arith.addf %12, %2 : vector<32x128xf32>
      %c0_10 = arith.constant 0 : index
      %c0_11 = arith.constant 0 : index
      %14 = vector.load %arg7[%c0_10, %c0_11] : memref<32x128xf32, #tpu.memory_space<vmem>>, vector<32x128xf32>
      tpu.vector_store %arg7[%c0_10, %c0_11], %13 {strides = array<i32>} : memref<32x128xf32, #tpu.memory_space<vmem>>, vector<32x128xf32>,
    } else {
    }
    %c0_i32_6 = arith.constant 0 : i32
    %9 = arith.cmpi eq, %arg2, %c0_i32_6 : i32
    %10 = arith.extui %9 : i1 to i32
    %c0_i32_7 = arith.constant 0 : i32
    %11 = arith.cmpi ne, %10, %c0_i32_7 : i32
    scf.if %11 {
      %c0_8 = arith.constant 0 : index
      %c0_9 = arith.constant 0 : index
      %12 = vector.load %arg7[%c0_8, %c0_9] : memref<32x128xf32, #tpu.memory_space<vmem>>, vector<32x128xf32>
      %c0_10 = arith.constant 0 : index
      %c0_11 = arith.constant 0 : index
      %13 = vector.load %arg5[%c0_10, %c0_11] : memref<1x128xf32, #tpu.memory_space<vmem>>, vector<1x128xf32>
      %14 = vector.broadcast %13 : vector<1x128xf32> to vector<32x128xf32>
      %15 = arith.addf %12, %14 : vector<32x128xf32>
      %cst_12 = arith.constant 0.000000e+00 : f32
      %16 = vector.broadcast %cst_12 : f32 to vector<32x128xf32>
      %17 = arith.maximumf %15, %16 : vector<32x128xf32>
      %18 = arith.truncf %17 : vector<32x128xf32> to vector<32x128xbf16>
      %c0_13 = arith.constant 0 : index
      %c0_14 = arith.constant 0 : index
      %19 = vector.load %arg6[%c0_13, %c0_14] : memref<32x128xbf16, #tpu.memory_space<vmem>>, vector<32x128xbf16>
      tpu.vector_store %arg6[%c0_13, %c0_14], %18 {strides = array<i32>} : memref<32x128xbf16, #tpu.memory_space<vmem>>, vector<32x128xbf16>,
    } else {
    }
    return
  }
  func.func @transform_0(%arg0: i32, %arg1: i32, %arg2: i32) -> (i32, i32) {
    %c0_i32 = arith.constant 0 : i32
    return %arg0, %arg2 : i32, i32
  }
  func.func @transform_1(%arg0: i32, %arg1: i32, %arg2: i32) -> (i32, i32) {
    %c0_i32 = arith.constant 0 : i32
    return %arg2, %arg1 : i32, i32
  }
  func.func @transform_2(%arg0: i32, %arg1: i32, %arg2: i32) -> (i32, i32) {
    %c0_i32 = arith.constant 0 : i32
    %c0_i32_0 = arith.constant 0 : i32
    return %c0_i32, %arg1 : i32, i32
  }
  func.func @transform_3(%arg0: i32, %arg1: i32, %arg2: i32) -> (i32, i32) {
    %c0_i32 = arith.constant 0 : i32
    return %arg0, %arg1 : i32, i32
  }
}

</mosaic_0001>

<llo_original>
// kernel: tpu_custom_call.1
$region0: #{tpu_custom_call.1}
  #allocation0 [shape = 'u32[]', space=smem, size = 0x4, offset = 0x4, fixed_abs, tag = 'smem constant byte address 0x4 - core index']
  #allocation1 [shape = 'u32[144,128]{1,0:T(1,128)}', space=vmem, size = 0x12000, scoped, tag = 'internal scratch']
  #allocation2 [shape = 'f32[32,128]{1,0:T(8,128)}', space=vmem, size = 0x4000, scoped, tag = 'scratch operand']
  %s0 = inlined_call_operand.hbm [shape: bf16[32,128], index: 0, kind: input, shape index: {}]
  %s1 = inlined_call_operand.hbm [shape: bf16[128,128], index: 1, kind: input, shape index: {}]
  %s2 = inlined_call_operand.vmem [shape: f32[1,128], index: 2, kind: input, shape index: {}]
  %s3 = inlined_call_operand.hbm [shape: bf16[32,128], index: 3, kind: output, shape index: {}]
  %s4 = sld [smem:[#allocation0]]
  $region42: #{tpu_custom_call.1} parent=0
    _
  %s6 = ssub.s32 1, %s4
  %s7 = scalar_select 0, %s6, %s4
  $region1: #{tpu_custom_call.1} parent=0
    #allocation3 [shape = 'u8[8192]{0}', space=vmem, size = 0x2000, scoped, tag = 'input window, operand 0, single buffered']
    #allocation4 [shape = 's32[1]{0}', space=sflag, size = 0x4, scoped, tag = 'scoped memory for tpu_custom_call.1']
    #allocation5 [shape = 's32[1]{0}', space=sflag, size = 0x4, scoped, tag = 'scoped memory for tpu_custom_call.1']
    #allocation6 [shape = 'u8[32768]{0}', space=vmem, size = 0x8000, scoped, tag = 'input window, operand 1, single buffered']
    #allocation7 [shape = 's32[1]{0}', space=sflag, size = 0x4, scoped, tag = 'scoped memory for tpu_custom_call.1']
    #allocation8 [shape = 'u8[8192]{0}', space=vmem, size = 0x2000, scoped, tag = 'output window, operand 0, single buffered']
    %8 = vsyncpa [#allocation4], 0
    %9 = vsyncpa [#allocation7], 0
    %10 = vsyncpa [#allocation5], 0
    // Predicated region
    $region2: #{tpu_custom_call.1} parent=1 // pred_check
      _
    $region3: #{tpu_custom_call.1} parent=1 // pred_check_branch
      %12 = sbr.rel (0) target = $region5
    $region4: #{tpu_custom_call.1} parent=1 // pred_region
      %s14 = ssub.s32 256, 256
      %15 = vsyncadd [#allocation4], %s14
      %s16 = sshll.u32 [#allocation3], 4
      %s17 = int_to_ptr.vmem [resolvable:$true] %s16
      %22 = dma.hbm_to_vmem [thread:$0]  %s0, 256, %s17, [#allocation4], 64, 64, 4
    $region5: #{tpu_custom_call.1} parent=1 // pred_fallthru
      _
    // Predicated region
    $region6: #{tpu_custom_call.1} parent=1 // pred_check
      _
    $region7: #{tpu_custom_call.1} parent=1 // pred_check_branch
      %24 = sbr.rel (0) target = $region9
    $region8: #{tpu_custom_call.1} parent=1 // pred_region
      %s26 = ssub.s32 1024, 1024
      %27 = vsyncadd [#allocation7], %s26
      %s28 = sshll.u32 [#allocation6], 4
      %s29 = int_to_ptr.vmem [resolvable:$true] %s28
      %34 = dma.hbm_to_vmem [thread:$0]  %s1, 1024, %s29, [#allocation7], 64, 64, 4
    $region9: #{tpu_custom_call.1} parent=1 // pred_fallthru
      _
    // Predicated region
    $region10: #{tpu_custom_call.1} parent=1 // pred_check
      _
    $region11: #{tpu_custom_call.1} parent=1 // pred_check_branch
      %36 = sbr.rel (0) target = $region13
    $region12: #{tpu_custom_call.1} parent=1 // pred_region
      _
    $region13: #{tpu_custom_call.1} parent=1 // pred_fallthru
      _
    // Predicated region
    $region14: #{tpu_custom_call.1} parent=1 // pred_check
      _
    $region15: #{tpu_custom_call.1} parent=1 // pred_check_branch
      %38 = sbr.rel (0) target = $region17
    $region16: #{tpu_custom_call.1} parent=1 // pred_region
      %39 = dma.done [#allocation4], 256
    $region17: #{tpu_custom_call.1} parent=1 // pred_fallthru
      _
    // Predicated region
    $region18: #{tpu_custom_call.1} parent=1 // pred_check
      _
    $region19: #{tpu_custom_call.1} parent=1 // pred_check_branch
      %41 = sbr.rel (0) target = $region21
    $region20: #{tpu_custom_call.1} parent=1 // pred_region
      %42 = dma.done [#allocation7], 1024
    $region21: #{tpu_custom_call.1} parent=1 // pred_fallthru
      _
    %v44 = vld [vmem:[#allocation3] sm:$0xf]
    %v45 = vld [vmem:[#allocation3 + $0x4] sm:$0xf]
    %v46 = vld [vmem:[#allocation3 + $0x8] sm:$0xf]
    %v47 = vld [vmem:[#allocation3 + $0xc] sm:$0xf]
    %v48 = vld [vmem:[#allocation6] sm:$0xf]
    %v49 = vld [vmem:[#allocation6 + $0x4] sm:$0xf]
    %v50 = vld [vmem:[#allocation6 + $0x8] sm:$0xf]
    %v51 = vld [vmem:[#allocation6 + $0xc] sm:$0xf]
    %v52 = vld [vmem:[#allocation6 + $0x10] sm:$0xf]
    %v53 = vld [vmem:[#allocation6 + $0x14] sm:$0xf]
    %v54 = vld [vmem:[#allocation6 + $0x18] sm:$0xf]
    %v55 = vld [vmem:[#allocation6 + $0x1c] sm:$0xf]
    %v56 = vld [vmem:[#allocation6 + $0x20] sm:$0xf]
    %v57 = vld [vmem:[#allocation6 + $0x24] sm:$0xf]
    %v58 = vld [vmem:[#allocation6 + $0x28] sm:$0xf]
    %v59 = vld [vmem:[#allocation6 + $0x2c] sm:$0xf]
    %v60 = vld [vmem:[#allocation6 + $0x30] sm:$0xf]
    %v61 = vld [vmem:[#allocation6 + $0x34] sm:$0xf]
    %v62 = vld [vmem:[#allocation6 + $0x38] sm:$0xf]
    %v63 = vld [vmem:[#allocation6 + $0x3c] sm:$0xf]
    %v68 = vunpack.c.l.b16 %v44
    %v69 = vunpack.c.l.b16 %v45
    %v70 = vunpack.c.l.b16 %v46
    %v71 = vunpack.c.l.b16 %v47
    %v72 = vpack.c.b16 %v69, %v68
    %v73 = vpack.c.b16 %v71, %v70
    %v92 = vunpack.c.l.b16 %v48
    %v93 = vunpack.c.l.b16 %v49
    %v94 = vunpack.c.l.b16 %v50
    %v95 = vunpack.c.l.b16 %v51
    %v96 = vunpack.c.l.b16 %v52
    %v97 = vunpack.c.l.b16 %v53
    %v98 = vunpack.c.l.b16 %v54
    %v99 = vunpack.c.l.b16 %v55
    %v100 = vunpack.c.l.b16 %v56
    %v101 = vunpack.c.l.b16 %v57
    %v102 = vunpack.c.l.b16 %v58
    %v103 = vunpack.c.l.b16 %v59
    %v104 = vunpack.c.l.b16 %v60
    %v105 = vunpack.c.l.b16 %v61
    %v106 = vunpack.c.l.b16 %v62
    %v107 = vunpack.c.l.b16 %v63
    %v108 = vpack.c.b16 %v93, %v92
    %v109 = vpack.c.b16 %v95, %v94
    %v110 = vpack.c.b16 %v97, %v96
    %v111 = vpack.c.b16 %v99, %v98
    %v112 = vpack.c.b16 %v101, %v100
    %v113 = vpack.c.b16 %v103, %v102
    %v114 = vpack.c.b16 %v105, %v104
    %v115 = vpack.c.b16 %v107, %v106
    %124 = vmatprep.subr.bf16.mxu0 0
    %125 = vmatpush1.bf16.msra.mxu0 %v108
    %126 = vmatprep.subr.bf16.mxu0 0
    %127 = vmatpush1.bf16.msra.mxu0 %v109
    %128 = vmatprep.subr.bf16.mxu0 0
    %129 = vmatpush1.bf16.msra.mxu0 %v110
    %130 = vmatprep.subr.bf16.mxu0 0
    %131 = vmatpush1.bf16.msra.mxu0 %v111
    %132 = vmatprep.subr.bf16.mxu0 0
    %133 = vmatpush1.bf16.msra.mxu0 %v112
    %134 = vmatprep.subr.bf16.mxu0 0
    %135 = vmatpush1.bf16.msra.mxu0 %v113
    %136 = vmatprep.subr.bf16.mxu0 0
    %137 = vmatpush1.bf16.msra.mxu0 %v114
    %138 = vmatprep.subr.bf16.mxu0 0
    %139 = vmatpush1.bf16.msra.mxu0 %v115
    %140 = vmatprep.subr.bf16.mxu0 0
    %141 = vmatpush1.bf16.msra.mxu0 0
    %142 = vmatprep.subr.bf16.mxu0 0
    %143 = vmatpush1.bf16.msra.mxu0 0
    %144 = vmatprep.subr.bf16.mxu0 0
    %145 = vmatpush1.bf16.msra.mxu0 0
    %146 = vmatprep.subr.bf16.mxu0 0
    %147 = vmatpush1.bf16.msra.mxu0 0
    %148 = vmatprep.subr.bf16.mxu0 0
    %149 = vmatpush1.bf16.msra.mxu0 0
    %150 = vmatprep.subr.bf16.mxu0 0
    %151 = vmatpush1.bf16.msra.mxu0 0
    %152 = vmatprep.subr.bf16.mxu0 0
    %153 = vmatpush1.bf16.msra.mxu0 0
    %154 = vmatprep.subr.bf16.mxu0 0
    %155 = vmatpush1.bf16.msra.mxu0 0
    %156 = vmatprep.mubr.bf16.mxu0 0
    %157 = vmatmul.mubr.bf16.gmra.mrb[0].mxu0 %v72
    %v158 = vpop.f32.mrb[0].mxu0
    %v159 = vadd.f32 0.0, %v158
    %v160 = vpop.f32.mrb[0].mxu0
    %v161 = vpop.f32.mrb[0].mxu0
    %v162 = vadd.f32 0.0, %v161
    %v163 = vpop.f32.mrb[0].mxu0
    %164 = vmatprep.mubr.bf16.mxu0 0
    %165 = vmatmul.mubr.bf16.gmra.mrb[0].mxu0 %v73
    %v166 = vpop.f32.mrb[0].mxu0
    %v167 = vadd.f32 0.0, %v166
    %v168 = vpop.f32.mrb[0].mxu0
    %v169 = vpop.f32.mrb[0].mxu0
    %v170 = vadd.f32 0.0, %v169
    %v171 = vpop.f32.mrb[0].mxu0
    %172 = vdwg.mxu0
    %p173 = scmp.eq.s32.totalorder 0, 0
    // Predicated region
    $region22: #{tpu_custom_call.1} parent=1 // pred_check
      %p174 = pneg %p173
    $region23: #{tpu_custom_call.1} parent=1 // pred_check_branch
      %176 = sbr.rel (%p174) target = $region25
    $region24: #{tpu_custom_call.1} parent=1 // pred_region
      %177 = vst [vmem:[#allocation2] sm:$0xff] %v159
      %178 = vst [vmem:[#allocation2 + $0x8] sm:$0xff] %v162
      %179 = vst [vmem:[#allocation2 + $0x10] sm:$0xff] %v167
      %180 = vst [vmem:[#allocation2 + $0x18] sm:$0xff] %v170
    $region25: #{tpu_custom_call.1} parent=1 // pred_fallthru
      _
    %p181 = scmp.gt.s32.totalorder 0, 0
    // Predicated region
    $region26: #{tpu_custom_call.1} parent=1 // pred_check
      %p182 = pneg %p181
    $region27: #{tpu_custom_call.1} parent=1 // pred_check_branch
      %184 = sbr.rel (%p182) target = $region29
    $region28: #{tpu_custom_call.1} parent=1 // pred_region
      %v185 = vld [vmem:[#allocation2] sm:$0xff]
      %v186 = vld [vmem:[#allocation2 + $0x8] sm:$0xff]
      %v187 = vld [vmem:[#allocation2 + $0x10] sm:$0xff]
      %v188 = vld [vmem:[#allocation2 + $0x18] sm:$0xff]
      %v189 = vadd.f32 %v185, %v159
      %v190 = vadd.f32 %v186, %v162
      %v191 = vadd.f32 %v187, %v167
      %v192 = vadd.f32 %v188, %v170
      %193 = vst [vmem:[#allocation2] sm:$0xff] %v189
      %194 = vst [vmem:[#allocation2 + $0x8] sm:$0xff] %v190
      %195 = vst [vmem:[#allocation2 + $0x10] sm:$0xff] %v191
      %196 = vst [vmem:[#allocation2 + $0x18] sm:$0xff] %v192
    $region29: #{tpu_custom_call.1} parent=1 // pred_fallthru
      _
    // Predicated region
    $region30: #{tpu_custom_call.1} parent=1 // pred_check
      %p197 = pneg %p173
    $region31: #{tpu_custom_call.1} parent=1 // pred_check_branch
      %199 = sbr.rel (%p197) target = $region33
    $region32: #{tpu_custom_call.1} parent=1 // pred_region
      %v200 = vld [vmem:[#allocation2] sm:$0xff]
      %v201 = vld [vmem:[#allocation2 + $0x8] sm:$0xff]
      %v202 = vld [vmem:[#allocation2 + $0x10] sm:$0xff]
      %v203 = vld [vmem:[#allocation2 + $0x18] sm:$0xff]
      %v204 = vld [vmem:[%s2] sm:$0x1]
      %v206 = vlaneseq
      %v207 = vshrl.u32 %v206, 7
      %v208 = vsub.s32 0, %v207
      %v209 = vrot.slane %v204, %v208
      %v211 = vadd.f32 %v200, %v209
      %v212 = vadd.f32 %v201, %v209
      %v213 = vadd.f32 %v202, %v209
      %v214 = vadd.f32 %v203, %v209
      %v215 = vmax.f32 %v211, 0.0
      %v216 = vmax.f32 %v212, 0.0
      %v217 = vmax.f32 %v213, 0.0
      %v218 = vmax.f32 %v214, 0.0
      %v219 = vpack.c.bf16 %v216, %v215
      %v220 = vpack.c.bf16 %v218, %v217
      %v223 = vunpack.c.l.b16 %v219
      %v224 = vunpack.c.h.b16 %v219
      %v225 = vunpack.c.l.b16 %v220
      %v226 = vunpack.c.h.b16 %v220
      %v227 = vpack.c.b16 %v223, %v223
      %v228 = vpack.c.b16 %v224, %v224
      %v229 = vpack.c.b16 %v225, %v225
      %v230 = vpack.c.b16 %v226, %v226
      %235 = vst [vmem:[#allocation8] sm:$0xf] %v227
      %236 = vst [vmem:[#allocation8 + $0x4] sm:$0xf] %v228
      %237 = vst [vmem:[#allocation8 + $0x8] sm:$0xf] %v229
      %238 = vst [vmem:[#allocation8 + $0xc] sm:$0xf] %v230
    $region33: #{tpu_custom_call.1} parent=1 // pred_fallthru
      _
    // Predicated region
    $region34: #{tpu_custom_call.1} parent=1 // pred_check
      _
    $region35: #{tpu_custom_call.1} parent=1 // pred_check_branch
      %240 = sbr.rel (0) target = $region37
    $region36: #{tpu_custom_call.1} parent=1 // pred_region
      %s242 = ssub.s32 256, 256
      %243 = vsyncadd [#allocation5], %s242
      %s244 = sshll.u32 [#allocation8], 4
      %s245 = int_to_ptr.vmem [resolvable:$true] %s244
      %250 = dma.vmem_to_hbm [thread:$0]  %s245, 256, %s3, [#allocation5], 64, 64, 4
    $region37: #{tpu_custom_call.1} parent=1 // pred_fallthru
      _
    // Predicated region
    $region38: #{tpu_custom_call.1} parent=1 // pred_check
      _
    $region39: #{tpu_custom_call.1} parent=1 // pred_check_branch
      %252 = sbr.rel (0) target = $region41
    $region40: #{tpu_custom_call.1} parent=1 // pred_region
      %253 = dma.done [#allocation5], 256
    $region41: #{tpu_custom_call.1} parent=1 // pred_fallthru
      _
    %254 = vsyncpa [#allocation4], 1
    %255 = vsyncpa [#allocation7], 1
    %256 = vsyncpa [#allocation5], 1

</llo_original>
